<compile_context>
chip_gen: v7x
topology: tpu7x:2x2x1
jax: 0.10.0
libtpu: 0.0.40
codegen_flags: <defaults>
</compile_context>

<pallas_src>
import functools

import jax
import jax.numpy as jnp
from jax.experimental import pallas as pl
from jax.experimental.pallas import tpu as pltpu

_HALO_BASE = 8  # sublane offset of y1 inside the conv2 halo scratch (vreg-aligned)


def _round_up(x, m):
    return (x + m - 1) // m * m


def _toeplitz_3x3(w, w_in, w_out, stride):
    """(3,3,Ci,Co) HWIO conv weight -> (3*W_in*Ci, W_out*Co) fused row-Toeplitz.

    Contraction block dy maps one H-padded input row (lane layout wx*Ci+ci) to
    one output row (lane layout wo*Co+co) for kernel row dy, with padding=1
    along W folded in.  The three dy blocks are stacked along the contraction
    axis so one MXU matmul per conv consumes the lane-concatenated row slices.
    """
    kh, kw, ci, co = w.shape
    dx = jnp.arange(kw)[:, None, None]
    wx = jnp.arange(w_in)[None, :, None]
    wo = jnp.arange(w_out)[None, None, :]
    t = (wx == wo * stride + dx - 1).astype(w.dtype)             # (kw, W_in, W_out)
    m = jnp.einsum("xwu,yxic->ywiuc", t, w)                      # (kh, W_in, Ci, W_out, Co)
    return m.reshape(kh * w_in * ci, w_out * co)


def _toeplitz_1x1(wp, w_in, w_out, stride):
    """(Ci,Co) 1x1 conv weight -> (W_in*Ci, W_out*Co) strided selection matrix."""
    ci, co = wp.shape
    wx = jnp.arange(w_in)[:, None]
    wo = jnp.arange(w_out)[None, :]
    t = (wx == wo * stride).astype(wp.dtype)                     # (W_in, W_out)
    m = jnp.einsum("wu,ic->wiuc", t, wp)                         # (W_in, Ci, W_out, Co)
    return m.reshape(w_in * ci, w_out * co)


def _residual_kernel(*refs, stride, use_1x1conv, eps):
    if use_1x1conv:
        (x_ref, w1_ref, g1_ref, be1_ref, w2_ref, g2_ref, be2_ref,
         wp_ref, bp_ref, fold_ref, exp_ref, out_ref, ypad_ref) = refs
    else:
        (x_ref, w1_ref, g1_ref, be1_ref, w2_ref, g2_ref, be2_ref,
         fold_ref, exp_ref, out_ref, ypad_ref) = refs
        wp_ref = bp_ref = None

    N, _, WC_in = x_ref.shape
    _, Ho, WC_out = out_ref.shape
    Cout = g1_ref.shape[1]
    Wo = WC_out // Cout
    B = _HALO_BASE

    def rows(ref, base, dy, s):
        start = base + dy
        if s == 1:
            return ref[:, start:start + Ho, :]
        # TODO(synk): for stride>1 fold the stride into the host layout / a grid
        # index_map instead of this strided sublane gather (XLU-heavy).
        return ref[:, start:start + (Ho - 1) * s + 1:s, :]

    def conv3x3(slices, w_ref_):
        # im2col over the 3 kernel rows: lane-concat the row slices, cast to
        # bf16, and do ONE MXU matmul with K = 3*K_in (f32 accumulation).
        cat = jnp.concatenate(slices, axis=-1).astype(jnp.bfloat16)
        return jnp.dot(cat.reshape(N * Ho, cat.shape[-1]), w_ref_[...],
                       preferred_element_type=jnp.float32)

    def bn_affine(acc, g_ref, be_ref):
        # Training-mode BN with fused E[x^2]-E[x]^2 statistics (all f32).
        # Per-channel fold/expand done with two batched (2,.) matmuls.
        cnt = float(acc.shape[0] * Wo)
        s1 = jnp.sum(acc, axis=0, keepdims=True)                   # (1, Wo*Cout)
        s2 = jnp.sum(acc * acc, axis=0, keepdims=True)             # (1, Wo*Cout)
        s12 = jnp.concatenate([s1, s2], axis=0)                    # (2, Wo*Cout)
        folded = jnp.dot(s12, fold_ref[...],
                         preferred_element_type=jnp.float32) / cnt  # (2, Cout)
        mean = folded[0:1]
        var = folded[1:2] - mean * mean                            # biased variance
        scale = g_ref[...] * jax.lax.rsqrt(var + eps)              # (1, Cout)
        shift = be_ref[...] - mean * scale
        ss = jnp.concatenate([scale, shift], axis=0)               # (2, Cout)
        lanes = jnp.dot(ss, exp_ref[...],
                        preferred_element_type=jnp.float32)        # (2, Wo*Cout)
        return acc * lanes[0:1] + lanes[1:2]                       # lane-dense affine

    # ---- shortcut first, written straight to out_ref (short live range) ----
    xs = rows(x_ref, 0, 1, stride)                                 # (N, Ho, WC_in)
    if use_1x1conv:
        sc = jnp.dot(xs.astype(jnp.bfloat16).reshape(N * Ho, WC_in), wp_ref[...],
                     preferred_element_type=jnp.float32) + bp_ref[...]
        out_ref[...] = sc.reshape(N, Ho, WC_out)
    else:
        out_ref[...] = xs                                          # needs WC_in == WC_out

    # ---- conv1 -> bn1 -> relu (conv biases dropped: cancelled by training BN) ----
    y1 = jnp.maximum(
        bn_affine(conv3x3([rows(x_ref, 0, dy, stride) for dy in range(3)], w1_ref),
                  g1_ref, be1_ref), 0.0)

    # conv2's H-halo scratch: zero ONLY the two halo rows; the interior write
    # lands at sublane offset 8 (an (8,128) tile boundary) -> unmasked store.
    ypad_ref[:, B - 1:B, :] = jnp.zeros((N, 1, WC_out), jnp.float32)
    ypad_ref[:, B + Ho:B + Ho + 1, :] = jnp.zeros((N, 1, WC_out), jnp.float32)
    ypad_ref[:, B:B + Ho, :] = y1.reshape(N, Ho, WC_out)

    # ---- conv2 -> bn2 ----
    y2 = bn_affine(conv3x3([rows(ypad_ref, B - 1, dy, 1) for dy in range(3)], w2_ref),
                   g2_ref, be2_ref)

    # ---- residual add + relu, lane-dense store ----
    out_ref[...] = jnp.maximum(y2.reshape(N, Ho, WC_out) + out_ref[...], 0.0)


def residual_forward(x_nchw, params, *, stride=1, use_1x1conv=False, eps=1e-5):
    """Pallas implementation of Residual.forward.  Input/output are NCHW."""
    x = jnp.transpose(x_nchw, (0, 2, 3, 1)).astype(jnp.float32)      # -> NHWC
    N, H, W, Cin = x.shape
    Cout = params["w1"].shape[-1]
    Ho = (H + 2 - 3) // stride + 1
    Wo = (W + 2 - 3) // stride + 1
    WC_in, WC_out = W * Cin, Wo * Cout

    # Lane-dense layout (N, H, W*Cin); H halo pre-padded once on the host
    # (rounded to a multiple of 8 sublanes).  W halo is folded into the weights.
    Hp = _round_up(H + 2, 8)
    xp = jnp.zeros((N, Hp, WC_in), jnp.float32)
    xp = xp.at[:, 1:1 + H, :].set(x.reshape(N, H, WC_in))

    # bf16 MXU operands (f32 accumulation via preferred_element_type in-kernel).
    w1t = _toeplitz_3x3(params["w1"].astype(jnp.float32), W, Wo, stride).astype(jnp.bfloat16)
    w2t = _toeplitz_3x3(params["w2"].astype(jnp.float32), Wo, Wo, 1).astype(jnp.bfloat16)

    # fold: (Wo*Cout, Cout) sums lanes of equal channel; expand = fold.T broadcasts back.
    fold = jnp.tile(jnp.eye(Cout, dtype=jnp.float32), (Wo, 1))
    expand = fold.T

    g1 = params["g1"].reshape(1, Cout).astype(jnp.float32)
    be1 = params["be1"].reshape(1, Cout).astype(jnp.float32)
    g2 = params["g2"].reshape(1, Cout).astype(jnp.float32)
    be2 = params["be2"].reshape(1, Cout).astype(jnp.float32)

    if use_1x1conv:
        wpt = _toeplitz_1x1(params["wp"].astype(jnp.float32), W, Wo, stride).astype(jnp.bfloat16)
        bp_lane = jnp.tile(params["bp"].reshape(-1).astype(jnp.float32),
                           Wo).reshape(1, WC_out)
        operands = (xp, w1t, g1, be1, w2t, g2, be2, wpt, bp_lane, fold, expand)
    else:
        # Don't ship dead shortcut operands (no DMA / VMEM residency for them).
        operands = (xp, w1t, g1, be1, w2t, g2, be2, fold, expand)

    scratch_rows = _HALO_BASE + Ho + 1

    # ~1.25x the actual resident footprint (no double-buffering: ungridded call),
    # floored at 16 MiB.  TODO(synk): re-derive per-tile once gridded (v7x: 64 MiB VMEM).
    total_bytes = sum(int(a.size) * a.dtype.itemsize for a in operands)
    total_bytes += N * Ho * WC_out * 4 + N * scratch_rows * WC_out * 4
    vmem_limit = max(int(1.25 * total_bytes), 16 << 20)

    kernel = functools.partial(_residual_kernel, stride=stride,
                               use_1x1conv=use_1x1conv, eps=eps)
    vmem = pl.BlockSpec(memory_space=pltpu.MemorySpace.VMEM)

    out = pl.pallas_call(
        kernel,
        out_shape=jax.ShapeDtypeStruct((N, Ho, WC_out), jnp.float32),
        in_specs=[vmem] * len(operands),
        out_specs=vmem,
        scratch_shapes=[pltpu.VMEM((N, scratch_rows, WC_out), jnp.float32)],
        compiler_params=pltpu.CompilerParams(vmem_limit_bytes=int(vmem_limit)),
    )(*operands)

    return jnp.transpose(out.reshape(N, Ho, Wo, Cout), (0, 3, 1, 2))  # -> NCHW


def residual_reference(x_nchw, params, *, stride=1, use_1x1conv=False, eps=1e-5):
    """Pure-JAX f32 reference (lax.conv) for correctness checking (keeps b1/b2)."""
    x = jnp.transpose(x_nchw, (0, 2, 3, 1)).astype(jnp.float32)
    dn = ("NHWC", "HWIO", "NHWC")

    def conv(t, w, b, s, pad):
        y = jax.lax.conv_general_dilated(t, w, (s, s), pad, dimension_numbers=dn)
        return y + b.reshape(1, 1, 1, -1)

    def bn(t, g, be):
        m = jnp.mean(t, axis=(0, 1, 2), keepdims=True)
        v = jnp.mean((t - m) ** 2, axis=(0, 1, 2), keepdims=True)
        return (t - m) * jax.lax.rsqrt(v + eps) * g.reshape(1, 1, 1, -1) + be.reshape(1, 1, 1, -1)

    y = jax.nn.relu(bn(conv(x, params["w1"], params["b1"], stride, [(1, 1), (1, 1)]),
                       params["g1"], params["be1"]))
    y = bn(conv(y, params["w2"], params["b2"], 1, [(1, 1), (1, 1)]),
           params["g2"], params["be2"])
    if use_1x1conv:
        wp = params["wp"].reshape(1, 1, *params["wp"].shape)
        sc = conv(x, wp, params["bp"], stride, [(0, 0), (0, 0)])
    else:
        sc = x
    return jnp.transpose(jax.nn.relu(y + sc), (0, 3, 1, 2))


if __name__ == "__main__":
    # Residual(in_channels=4, out_channels=8, use_1x1conv=True, stride=1)
    N, Cin, H, W = 2, 4, 16, 16
    Cout = 8
    stride = 1
    use_1x1conv = True   # required for the residual add since Cin != Cout

    key = jax.random.PRNGKey(0)
    ks = jax.random.split(key, 11)

    def conv_w(k, kh, kw, ci, co):
        return jax.random.normal(k, (kh, kw, ci, co), jnp.float32) * jnp.sqrt(2.0 / (kh * kw * ci))

    params = {
        "w1": conv_w(ks[0], 3, 3, Cin, Cout),
        "b1": 0.1 * jax.random.normal(ks[1], (1, Cout), jnp.float32),   # used by reference only
        "g1": 1.0 + 0.1 * jax.random.normal(ks[2], (1, Cout), jnp.float32),
        "be1": 0.1 * jax.random.normal(ks[3], (1, Cout), jnp.float32),
        "w2": conv_w(ks[4], 3, 3, Cout, Cout),
        "b2": 0.1 * jax.random.normal(ks[5], (1, Cout), jnp.float32),   # used by reference only
        "g2": 1.0 + 0.1 * jax.random.normal(ks[6], (1, Cout), jnp.float32),
        "be2": 0.1 * jax.random.normal(ks[7], (1, Cout), jnp.float32),
        "wp": jax.random.normal(ks[8], (Cin, Cout), jnp.float32) * jnp.sqrt(2.0 / Cin),
        "bp": 0.1 * jax.random.normal(ks[9], (1, Cout), jnp.float32),
    }
    x = jax.random.normal(ks[10], (N, Cin, H, W), jnp.float32)

    out = residual_forward(x, params, stride=stride, use_1x1conv=use_1x1conv)
    out = jax.block_until_ready(out)

    ref = residual_reference(x, params, stride=stride, use_1x1conv=use_1x1conv)
    max_err = float(jnp.max(jnp.abs(out - ref)))
    assert out.shape == ref.shape, (out.shape, ref.shape)
    # Tolerance sized for bf16 MXU operands through two chained convs + BN
    # (reference is pure f32); BN statistics/affine remain f32 in the kernel.
    if max_err < 5e-2:
        print("KERNEL_OK")
    else:
        print(f"MISMATCH max_err={max_err}")
</pallas_src>

<mosaic_0001>
module attributes {stable_mosaic.version = 11 : i64} {
  func.func @_residual_kernel(%arg0: memref<2x24x64xf32, #tpu.memory_space<vmem>>, %arg1: memref<192x128xbf16, #tpu.memory_space<vmem>>, %arg2: memref<1x8xf32, #tpu.memory_space<vmem>>, %arg3: memref<1x8xf32, #tpu.memory_space<vmem>>, %arg4: memref<384x128xbf16, #tpu.memory_space<vmem>>, %arg5: memref<1x8xf32, #tpu.memory_space<vmem>>, %arg6: memref<1x8xf32, #tpu.memory_space<vmem>>, %arg7: memref<64x128xbf16, #tpu.memory_space<vmem>>, %arg8: memref<1x128xf32, #tpu.memory_space<vmem>>, %arg9: memref<128x8xf32, #tpu.memory_space<vmem>>, %arg10: memref<8x128xf32, #tpu.memory_space<vmem>>, %arg11: memref<2x16x128xf32, #tpu.memory_space<vmem>>, %arg12: memref<2x25x128xf32, #tpu.memory_space<vmem>>) attributes {dimension_semantics = [], scalar_prefetch = 0 : i64, scratch_operands = 1 : i64, tpu.core_type = #tpu.core_type<tc>} {
    %c0 = arith.constant 0 : index
    %c1 = arith.constant 1 : index
    %c0_0 = arith.constant 0 : index
    %0 = vector.load %arg0[%c0, %c1, %c0_0] : memref<2x24x64xf32, #tpu.memory_space<vmem>>, vector<2x16x64xf32>
    %1 = arith.truncf %0 : vector<2x16x64xf32> to vector<2x16x64xbf16>
    %2 = vector.shape_cast %1 : vector<2x16x64xbf16> to vector<32x64xbf16>
    %c0_1 = arith.constant 0 : index
    %c0_2 = arith.constant 0 : index
    %3 = vector.load %arg7[%c0_1, %c0_2] : memref<64x128xbf16, #tpu.memory_space<vmem>>, vector<64x128xbf16>
    %cst = arith.constant dense<0.000000e+00> : vector<32x128xf32>
    %4 = tpu.matmul %2, %3, %cst {dimension_numbers = #tpu.dot_dimension_numbers<[1], [0], [0], [1], [0, 0, 1, 1], [], []>} : vector<32x64xbf16>, vector<64x128xbf16>, vector<32x128xf32> -> vector<32x128xf32>
    %c0_3 = arith.constant 0 : index
    %c0_4 = arith.constant 0 : index
    %5 = vector.load %arg8[%c0_3, %c0_4] : memref<1x128xf32, #tpu.memory_space<vmem>>, vector<1x128xf32>
    %6 = vector.broadcast %5 : vector<1x128xf32> to vector<32x128xf32>
    %7 = arith.addf %4, %6 : vector<32x128xf32>
    %8 = vector.shape_cast %7 : vector<32x128xf32> to vector<2x16x128xf32>
    %c0_5 = arith.constant 0 : index
    %c0_6 = arith.constant 0 : index
    %c0_7 = arith.constant 0 : index
    %9 = vector.load %arg11[%c0_5, %c0_6, %c0_7] : memref<2x16x128xf32, #tpu.memory_space<vmem>>, vector<2x16x128xf32>
    tpu.vector_store %arg11[%c0_5, %c0_6, %c0_7], %8 {strides = array<i32>} : memref<2x16x128xf32, #tpu.memory_space<vmem>>, vector<2x16x128xf32>,
    %c0_8 = arith.constant 0 : index
    %c0_9 = arith.constant 0 : index
    %c0_10 = arith.constant 0 : index
    %10 = vector.load %arg0[%c0_8, %c0_9, %c0_10] : memref<2x24x64xf32, #tpu.memory_space<vmem>>, vector<2x16x64xf32>
    %c0_11 = arith.constant 0 : index
    %c1_12 = arith.constant 1 : index
    %c0_13 = arith.constant 0 : index
    %11 = vector.load %arg0[%c0_11, %c1_12, %c0_13] : memref<2x24x64xf32, #tpu.memory_space<vmem>>, vector<2x16x64xf32>
    %c0_14 = arith.constant 0 : index
    %c2 = arith.constant 2 : index
    %c0_15 = arith.constant 0 : index
    %12 = vector.load %arg0[%c0_14, %c2, %c0_15] : memref<2x24x64xf32, #tpu.memory_space<vmem>>, vector<2x16x64xf32>
    %13 = tpu.concatenate %10, %11, %12 in 2 : vector<2x16x64xf32>, vector<2x16x64xf32>, vector<2x16x64xf32> -> vector<2x16x192xf32>
    %14 = arith.truncf %13 : vector<2x16x192xf32> to vector<2x16x192xbf16>
    %15 = vector.shape_cast %14 : vector<2x16x192xbf16> to vector<32x192xbf16>
    %c0_16 = arith.constant 0 : index
    %c0_17 = arith.constant 0 : index
    %16 = vector.load %arg1[%c0_16, %c0_17] : memref<192x128xbf16, #tpu.memory_space<vmem>>, vector<192x128xbf16>
    %cst_18 = arith.constant dense<0.000000e+00> : vector<32x128xf32>
    %17 = tpu.matmul %15, %16, %cst_18 {dimension_numbers = #tpu.dot_dimension_numbers<[1], [0], [0], [1], [0, 0, 1, 1], [], []>} : vector<32x192xbf16>, vector<192x128xbf16>, vector<32x128xf32> -> vector<32x128xf32>
    %cst_19 = arith.constant dense<0.000000e+00> : vector<128xf32>
    %18 = vector.multi_reduction <add>, %17, %cst_19 [0] : vector<32x128xf32> to vector<128xf32>
    %19 = vector.shape_cast %18 : vector<128xf32> to vector<1x128xf32>
    %20 = arith.mulf %17, %17 : vector<32x128xf32>
    %cst_20 = arith.constant dense<0.000000e+00> : vector<128xf32>
    %21 = vector.multi_reduction <add>, %20, %cst_20 [0] : vector<32x128xf32> to vector<128xf32>
    %22 = vector.shape_cast %21 : vector<128xf32> to vector<1x128xf32>
    %23 = tpu.concatenate %19, %22 in 0 : vector<1x128xf32>, vector<1x128xf32> -> vector<2x128xf32>
    %c0_21 = arith.constant 0 : index
    %c0_22 = arith.constant 0 : index
    %24 = vector.load %arg9[%c0_21, %c0_22] : memref<128x8xf32, #tpu.memory_space<vmem>>, vector<128x8xf32>
    %cst_23 = arith.constant dense<0.000000e+00> : vector<2x8xf32>
    %25 = tpu.matmul %23, %24, %cst_23 {dimension_numbers = #tpu.dot_dimension_numbers<[1], [0], [0], [1], [0, 0, 1, 1], [], []>} : vector<2x128xf32>, vector<128x8xf32>, vector<2x8xf32> -> vector<2x8xf32>
    %cst_24 = arith.constant 5.120000e+02 : f32
    %26 = vector.broadcast %cst_24 : f32 to vector<2x8xf32>
    %27 = arith.divf %25, %26 : vector<2x8xf32>
    %28 = vector.extract_strided_slice %27 {offsets = [0, 0], sizes = [1, 8], strides = [1, 1]} : vector<2x8xf32> to vector<1x8xf32>
    %29 = vector.extract_strided_slice %27 {offsets = [1, 0], sizes = [1, 8], strides = [1, 1]} : vector<2x8xf32> to vector<1x8xf32>
    %30 = arith.mulf %28, %28 : vector<1x8xf32>
    %31 = arith.subf %29, %30 : vector<1x8xf32>
    %c0_25 = arith.constant 0 : index
    %c0_26 = arith.constant 0 : index
    %32 = vector.load %arg2[%c0_25, %c0_26] : memref<1x8xf32, #tpu.memory_space<vmem>>, vector<1x8xf32>
    %cst_27 = arith.constant 9.99999974E-6 : f32
    %33 = vector.broadcast %cst_27 : f32 to vector<1x8xf32>
    %34 = arith.addf %31, %33 : vector<1x8xf32>
    %35 = math.rsqrt %34 : vector<1x8xf32>
    %36 = arith.mulf %32, %35 : vector<1x8xf32>
    %c0_28 = arith.constant 0 : index
    %c0_29 = arith.constant 0 : index
    %37 = vector.load %arg3[%c0_28, %c0_29] : memref<1x8xf32, #tpu.memory_space<vmem>>, vector<1x8xf32>
    %38 = arith.mulf %28, %36 : vector<1x8xf32>
    %39 = arith.subf %37, %38 : vector<1x8xf32>
    %40 = tpu.concatenate %36, %39 in 0 : vector<1x8xf32>, vector<1x8xf32> -> vector<2x8xf32>
    %c0_30 = arith.constant 0 : index
    %c0_31 = arith.constant 0 : index
    %41 = vector.load %arg10[%c0_30, %c0_31] : memref<8x128xf32, #tpu.memory_space<vmem>>, vector<8x128xf32>
    %cst_32 = arith.constant dense<0.000000e+00> : vector<2x128xf32>
    %42 = tpu.matmul %40, %41, %cst_32 {dimension_numbers = #tpu.dot_dimension_numbers<[1], [0], [0], [1], [0, 0, 1, 1], [], []>} : vector<2x8xf32>, vector<8x128xf32>, vector<2x128xf32> -> vector<2x128xf32>
    %43 = vector.extract_strided_slice %42 {offsets = [0, 0], sizes = [1, 128], strides = [1, 1]} : vector<2x128xf32> to vector<1x128xf32>
    %44 = vector.broadcast %43 : vector<1x128xf32> to vector<32x128xf32>
    %45 = arith.mulf %17, %44 : vector<32x128xf32>
    %46 = vector.extract_strided_slice %42 {offsets = [1, 0], sizes = [1, 128], strides = [1, 1]} : vector<2x128xf32> to vector<1x128xf32>
    %47 = vector.broadcast %46 : vector<1x128xf32> to vector<32x128xf32>
    %48 = arith.addf %45, %47 : vector<32x128xf32>
    %cst_33 = arith.constant 0.000000e+00 : f32
    %49 = vector.broadcast %cst_33 : f32 to vector<32x128xf32>
    %50 = arith.maximumf %48, %49 : vector<32x128xf32>
    %cst_34 = arith.constant 0.000000e+00 : f32
    %51 = vector.broadcast %cst_34 : f32 to vector<2x1x128xf32>
    %c0_35 = arith.constant 0 : index
    %c7 = arith.constant 7 : index
    %c0_36 = arith.constant 0 : index
    %52 = vector.load %arg12[%c0_35, %c7, %c0_36] : memref<2x25x128xf32, #tpu.memory_space<vmem>>, vector<2x1x128xf32>
    tpu.vector_store %arg12[%c0_35, %c7, %c0_36], %51 {strides = array<i32>} : memref<2x25x128xf32, #tpu.memory_space<vmem>>, vector<2x1x128xf32>,
    %cst_37 = arith.constant 0.000000e+00 : f32
    %53 = vector.broadcast %cst_37 : f32 to vector<2x1x128xf32>
    %c0_38 = arith.constant 0 : index
    %c24 = arith.constant 24 : index
    %c0_39 = arith.constant 0 : index
    %54 = vector.load %arg12[%c0_38, %c24, %c0_39] : memref<2x25x128xf32, #tpu.memory_space<vmem>>, vector<2x1x128xf32>
    tpu.vector_store %arg12[%c0_38, %c24, %c0_39], %53 {strides = array<i32>} : memref<2x25x128xf32, #tpu.memory_space<vmem>>, vector<2x1x128xf32>,
    %55 = vector.shape_cast %50 : vector<32x128xf32> to vector<2x16x128xf32>
    %c0_40 = arith.constant 0 : index
    %c8 = arith.constant 8 : index
    %c0_41 = arith.constant 0 : index
    %56 = vector.load %arg12[%c0_40, %c8, %c0_41] : memref<2x25x128xf32, #tpu.memory_space<vmem>>, vector<2x16x128xf32>
    tpu.vector_store %arg12[%c0_40, %c8, %c0_41], %55 {strides = array<i32>} : memref<2x25x128xf32, #tpu.memory_space<vmem>>, vector<2x16x128xf32>,
    %c0_42 = arith.constant 0 : index
    %c7_43 = arith.constant 7 : index
    %c0_44 = arith.constant 0 : index
    %57 = vector.load %arg12[%c0_42, %c7_43, %c0_44] : memref<2x25x128xf32, #tpu.memory_space<vmem>>, vector<2x16x128xf32>
    %c0_45 = arith.constant 0 : index
    %c8_46 = arith.constant 8 : index
    %c0_47 = arith.constant 0 : index
    %58 = vector.load %arg12[%c0_45, %c8_46, %c0_47] : memref<2x25x128xf32, #tpu.memory_space<vmem>>, vector<2x16x128xf32>
    %c0_48 = arith.constant 0 : index
    %c9 = arith.constant 9 : index
    %c0_49 = arith.constant 0 : index
    %59 = vector.load %arg12[%c0_48, %c9, %c0_49] : memref<2x25x128xf32, #tpu.memory_space<vmem>>, vector<2x16x128xf32>
    %60 = tpu.concatenate %57, %58, %59 in 2 : vector<2x16x128xf32>, vector<2x16x128xf32>, vector<2x16x128xf32> -> vector<2x16x384xf32>
    %61 = arith.truncf %60 : vector<2x16x384xf32> to vector<2x16x384xbf16>
    %62 = vector.shape_cast %61 : vector<2x16x384xbf16> to vector<32x384xbf16>
    %c0_50 = arith.constant 0 : index
    %c0_51 = arith.constant 0 : index
    %63 = vector.load %arg4[%c0_50, %c0_51] : memref<384x128xbf16, #tpu.memory_space<vmem>>, vector<384x128xbf16>
    %cst_52 = arith.constant dense<0.000000e+00> : vector<32x128xf32>
    %64 = tpu.matmul %62, %63, %cst_52 {dimension_numbers = #tpu.dot_dimension_numbers<[1], [0], [0], [1], [0, 0, 1, 1], [], []>} : vector<32x384xbf16>, vector<384x128xbf16>, vector<32x128xf32> -> vector<32x128xf32>
    %cst_53 = arith.constant dense<0.000000e+00> : vector<128xf32>
    %65 = vector.multi_reduction <add>, %64, %cst_53 [0] : vector<32x128xf32> to vector<128xf32>
    %66 = vector.shape_cast %65 : vector<128xf32> to vector<1x128xf32>
    %67 = arith.mulf %64, %64 : vector<32x128xf32>
    %cst_54 = arith.constant dense<0.000000e+00> : vector<128xf32>
    %68 = vector.multi_reduction <add>, %67, %cst_54 [0] : vector<32x128xf32> to vector<128xf32>
    %69 = vector.shape_cast %68 : vector<128xf32> to vector<1x128xf32>
    %70 = tpu.concatenate %66, %69 in 0 : vector<1x128xf32>, vector<1x128xf32> -> vector<2x128xf32>
    %c0_55 = arith.constant 0 : index
    %c0_56 = arith.constant 0 : index
    %71 = vector.load %arg9[%c0_55, %c0_56] : memref<128x8xf32, #tpu.memory_space<vmem>>, vector<128x8xf32>
    %cst_57 = arith.constant dense<0.000000e+00> : vector<2x8xf32>
    %72 = tpu.matmul %70, %71, %cst_57 {dimension_numbers = #tpu.dot_dimension_numbers<[1], [0], [0], [1], [0, 0, 1, 1], [], []>} : vector<2x128xf32>, vector<128x8xf32>, vector<2x8xf32> -> vector<2x8xf32>
    %cst_58 = arith.constant 5.120000e+02 : f32
    %73 = vector.broadcast %cst_58 : f32 to vector<2x8xf32>
    %74 = arith.divf %72, %73 : vector<2x8xf32>
    %75 = vector.extract_strided_slice %74 {offsets = [0, 0], sizes = [1, 8], strides = [1, 1]} : vector<2x8xf32> to vector<1x8xf32>
    %76 = vector.extract_strided_slice %74 {offsets = [1, 0], sizes = [1, 8], strides = [1, 1]} : vector<2x8xf32> to vector<1x8xf32>
    %77 = arith.mulf %75, %75 : vector<1x8xf32>
    %78 = arith.subf %76, %77 : vector<1x8xf32>
    %c0_59 = arith.constant 0 : index
    %c0_60 = arith.constant 0 : index
    %79 = vector.load %arg5[%c0_59, %c0_60] : memref<1x8xf32, #tpu.memory_space<vmem>>, vector<1x8xf32>
    %cst_61 = arith.constant 9.99999974E-6 : f32
    %80 = vector.broadcast %cst_61 : f32 to vector<1x8xf32>
    %81 = arith.addf %78, %80 : vector<1x8xf32>
    %82 = math.rsqrt %81 : vector<1x8xf32>
    %83 = arith.mulf %79, %82 : vector<1x8xf32>
    %c0_62 = arith.constant 0 : index
    %c0_63 = arith.constant 0 : index
    %84 = vector.load %arg6[%c0_62, %c0_63] : memref<1x8xf32, #tpu.memory_space<vmem>>, vector<1x8xf32>
    %85 = arith.mulf %75, %83 : vector<1x8xf32>
    %86 = arith.subf %84, %85 : vector<1x8xf32>
    %87 = tpu.concatenate %83, %86 in 0 : vector<1x8xf32>, vector<1x8xf32> -> vector<2x8xf32>
    %c0_64 = arith.constant 0 : index
    %c0_65 = arith.constant 0 : index
    %88 = vector.load %arg10[%c0_64, %c0_65] : memref<8x128xf32, #tpu.memory_space<vmem>>, vector<8x128xf32>
    %cst_66 = arith.constant dense<0.000000e+00> : vector<2x128xf32>
    %89 = tpu.matmul %87, %88, %cst_66 {dimension_numbers = #tpu.dot_dimension_numbers<[1], [0], [0], [1], [0, 0, 1, 1], [], []>} : vector<2x8xf32>, vector<8x128xf32>, vector<2x128xf32> -> vector<2x128xf32>
    %90 = vector.extract_strided_slice %89 {offsets = [0, 0], sizes = [1, 128], strides = [1, 1]} : vector<2x128xf32> to vector<1x128xf32>
    %91 = vector.broadcast %90 : vector<1x128xf32> to vector<32x128xf32>
    %92 = arith.mulf %64, %91 : vector<32x128xf32>
    %93 = vector.extract_strided_slice %89 {offsets = [1, 0], sizes = [1, 128], strides = [1, 1]} : vector<2x128xf32> to vector<1x128xf32>
    %94 = vector.broadcast %93 : vector<1x128xf32> to vector<32x128xf32>
    %95 = arith.addf %92, %94 : vector<32x128xf32>
    %96 = vector.shape_cast %95 : vector<32x128xf32> to vector<2x16x128xf32>
    %c0_67 = arith.constant 0 : index
    %c0_68 = arith.constant 0 : index
    %c0_69 = arith.constant 0 : index
    %97 = vector.load %arg11[%c0_67, %c0_68, %c0_69] : memref<2x16x128xf32, #tpu.memory_space<vmem>>, vector<2x16x128xf32>
    %98 = arith.addf %96, %97 : vector<2x16x128xf32>
    %cst_70 = arith.constant 0.000000e+00 : f32
    %99 = vector.broadcast %cst_70 : f32 to vector<2x16x128xf32>
    %100 = arith.maximumf %98, %99 : vector<2x16x128xf32>
    %c0_71 = arith.constant 0 : index
    %c0_72 = arith.constant 0 : index
    %c0_73 = arith.constant 0 : index
    %101 = vector.load %arg11[%c0_71, %c0_72, %c0_73] : memref<2x16x128xf32, #tpu.memory_space<vmem>>, vector<2x16x128xf32>
    tpu.vector_store %arg11[%c0_71, %c0_72, %c0_73], %100 {strides = array<i32>} : memref<2x16x128xf32, #tpu.memory_space<vmem>>, vector<2x16x128xf32>,
    return
  }
}

</mosaic_0001>

<llo_original>
// kernel: tpu_custom_call.1
$region0: #{tpu_custom_call.1}
  #allocation0 [shape = 'u32[]', space=smem, size = 0x4, offset = 0x4, fixed_abs, tag = 'smem constant byte address 0x4 - core index']
  #allocation1 [shape = 'u32[144,128]{1,0:T(1,128)}', space=vmem, size = 0x12000, scoped, tag = 'internal scratch']
  #allocation2 [shape = 'f32[2,25,128]{2,1,0:T(8,128)}', space=vmem, size = 0x8000, scoped, tag = 'scratch operand']
  %s0 = inlined_call_operand.hbm [shape: f32[2,24,64], index: 0, kind: input, shape index: {}]
  %s1 = inlined_call_operand.vmem [shape: bf16[192,128], index: 1, kind: input, shape index: {}]
  %s2 = inlined_call_operand.vmem [shape: f32[1,8], index: 2, kind: input, shape index: {}]
  %s3 = inlined_call_operand.vmem [shape: f32[1,8], index: 3, kind: input, shape index: {}]
  %s4 = inlined_call_operand.hbm [shape: bf16[384,128], index: 4, kind: input, shape index: {}]
  %s5 = inlined_call_operand.vmem [shape: f32[1,8], index: 5, kind: input, shape index: {}]
  %s6 = inlined_call_operand.vmem [shape: f32[1,8], index: 6, kind: input, shape index: {}]
  %s7 = inlined_call_operand.vmem [shape: bf16[64,128], index: 7, kind: input, shape index: {}]
  %s8 = inlined_call_operand.vmem [shape: f32[1,128], index: 8, kind: input, shape index: {}]
  %s9 = inlined_call_operand.vmem [shape: f32[128,8], index: 9, kind: input, shape index: {}]
  %s10 = inlined_call_operand.vmem [shape: f32[8,128], index: 10, kind: input, shape index: {}]
  %s11 = inlined_call_operand.hbm [shape: f32[2,16,128], index: 11, kind: output, shape index: {}]
  %s12 = sld [smem:[#allocation0]]
  $region62: #{tpu_custom_call.1} parent=0
    _
  %s14 = ssub.s32 1, %s12
  %s15 = scalar_select 0, %s14, %s12
  $region1: #{tpu_custom_call.1} parent=0
    #allocation3 [shape = 'u8[24576]{0}', space=vmem, size = 0x6000, scoped, tag = 'input window, operand 0, single buffered']
    #allocation4 [shape = 's32[1]{0}', space=sflag, size = 0x4, scoped, tag = 'scoped memory for tpu_custom_call.1']
    #allocation5 [shape = 's32[1]{0}', space=sflag, size = 0x4, scoped, tag = 'scoped memory for tpu_custom_call.1']
    #allocation6 [shape = 'u8[98304]{0}', space=vmem, size = 0x18000, scoped, tag = 'input window, operand 4, single buffered']
    #allocation7 [shape = 's32[1]{0}', space=sflag, size = 0x4, scoped, tag = 'scoped memory for tpu_custom_call.1']
    #allocation8 [shape = 'u8[16384]{0}', space=vmem, size = 0x4000, scoped, tag = 'output window, operand 0, single buffered']
    %16 = vsyncpa [#allocation4], 0
    %17 = vsyncpa [#allocation7], 0
    %18 = vsyncpa [#allocation5], 0
    // Predicated region
    $region2: #{tpu_custom_call.1} parent=1 // pred_check
      _
    $region3: #{tpu_custom_call.1} parent=1 // pred_check_branch
      %20 = sbr.rel (0) target = $region5
    $region4: #{tpu_custom_call.1} parent=1 // pred_region
      %s22 = ssub.s32 768, 768
      %23 = vsyncadd [#allocation4], %s22
      %s24 = sshll.u32 [#allocation3], 4
      %s25 = int_to_ptr.vmem [resolvable:$true] %s24
      %30 = dma.hbm_to_vmem [thread:$0]  %s0, 768, %s25, [#allocation4], 128, 128, 8
    $region5: #{tpu_custom_call.1} parent=1 // pred_fallthru
      _
    // Predicated region
    $region6: #{tpu_custom_call.1} parent=1 // pred_check
      _
    $region7: #{tpu_custom_call.1} parent=1 // pred_check_branch
      %32 = sbr.rel (0) target = $region9
    $region8: #{tpu_custom_call.1} parent=1 // pred_region
      _
    $region9: #{tpu_custom_call.1} parent=1 // pred_fallthru
      _
    // Predicated region
    $region10: #{tpu_custom_call.1} parent=1 // pred_check
      _
    $region11: #{tpu_custom_call.1} parent=1 // pred_check_branch
      %34 = sbr.rel (0) target = $region13
    $region12: #{tpu_custom_call.1} parent=1 // pred_region
      _
    $region13: #{tpu_custom_call.1} parent=1 // pred_fallthru
      _
    // Predicated region
    $region14: #{tpu_custom_call.1} parent=1 // pred_check
      _
    $region15: #{tpu_custom_call.1} parent=1 // pred_check_branch
      %36 = sbr.rel (0) target = $region17
    $region16: #{tpu_custom_call.1} parent=1 // pred_region
      _
    $region17: #{tpu_custom_call.1} parent=1 // pred_fallthru
      _
    // Predicated region
    $region18: #{tpu_custom_call.1} parent=1 // pred_check
      _
    $region19: #{tpu_custom_call.1} parent=1 // pred_check_branch
      %38 = sbr.rel (0) target = $region21
    $region20: #{tpu_custom_call.1} parent=1 // pred_region
      %s40 = ssub.s32 3072, 3072
      %41 = vsyncadd [#allocation7], %s40
      %s42 = sshll.u32 [#allocation6], 4
      %s43 = int_to_ptr.vmem [resolvable:$true] %s42
      %48 = dma.hbm_to_vmem [thread:$0]  %s4, 3072, %s43, [#allocation7], 64, 64, 4
    $region21: #{tpu_custom_call.1} parent=1 // pred_fallthru
      _
    // Predicated region
    $region22: #{tpu_custom_call.1} parent=1 // pred_check
      _
    $region23: #{tpu_custom_call.1} parent=1 // pred_check_branch
      %50 = sbr.rel (0) target = $region25
    $region24: #{tpu_custom_call.1} parent=1 // pred_region
      _
    $region25: #{tpu_custom_call.1} parent=1 // pred_fallthru
      _
    // Predicated region
    $region26: #{tpu_custom_call.1} parent=1 // pred_check
      _
    $region27: #{tpu_custom_call.1} parent=1 // pred_check_branch
      %52 = sbr.rel (0) target = $region29
    $region28: #{tpu_custom_call.1} parent=1 // pred_region
      _
    $region29: #{tpu_custom_call.1} parent=1 // pred_fallthru
      _
    // Predicated region
    $region30: #{tpu_custom_call.1} parent=1 // pred_check
      _
    $region31: #{tpu_custom_call.1} parent=1 // pred_check_branch
      %54 = sbr.rel (0) target = $region33
    $region32: #{tpu_custom_call.1} parent=1 // pred_region
      _
    $region33: #{tpu_custom_call.1} parent=1 // pred_fallthru
      _
    // Predicated region
    $region34: #{tpu_custom_call.1} parent=1 // pred_check
      _
    $region35: #{tpu_custom_call.1} parent=1 // pred_check_branch
      %56 = sbr.rel (0) target = $region37
    $region36: #{tpu_custom_call.1} parent=1 // pred_region
      _
    $region37: #{tpu_custom_call.1} parent=1 // pred_fallthru
      _
    // Predicated region
    $region38: #{tpu_custom_call.1} parent=1 // pred_check
      _
    $region39: #{tpu_custom_call.1} parent=1 // pred_check_branch
      %58 = sbr.rel (0) target = $region41
    $region40: #{tpu_custom_call.1} parent=1 // pred_region
      _
    $region41: #{tpu_custom_call.1} parent=1 // pred_fallthru
      _
    // Predicated region
    $region42: #{tpu_custom_call.1} parent=1 // pred_check
      _
    $region43: #{tpu_custom_call.1} parent=1 // pred_check_branch
      %60 = sbr.rel (0) target = $region45
    $region44: #{tpu_custom_call.1} parent=1 // pred_region
      _
    $region45: #{tpu_custom_call.1} parent=1 // pred_fallthru
      _
    // Predicated region
    $region46: #{tpu_custom_call.1} parent=1 // pred_check
      _
    $region47: #{tpu_custom_call.1} parent=1 // pred_check_branch
      %62 = sbr.rel (0) target = $region49
    $region48: #{tpu_custom_call.1} parent=1 // pred_region
      %63 = dma.done [#allocation4], 768
    $region49: #{tpu_custom_call.1} parent=1 // pred_fallthru
      _
    // Predicated region
    $region50: #{tpu_custom_call.1} parent=1 // pred_check
      _
    $region51: #{tpu_custom_call.1} parent=1 // pred_check_branch
      %65 = sbr.rel (0) target = $region53
    $region52: #{tpu_custom_call.1} parent=1 // pred_region
      %66 = dma.done [#allocation7], 3072
    $region53: #{tpu_custom_call.1} parent=1 // pred_fallthru
      _
    %v68 = vld [vmem:[#allocation3 + $0x1] sm:$0xff]
    %v69 = vld [vmem:[#allocation3 + $0x9] sm:$0xff]
    %v70 = vld [vmem:[#allocation3 + $0x19] sm:$0xff]
    %v71 = vld [vmem:[#allocation3 + $0x21] sm:$0xff]
    %v72 = vpack.c.bf16 %v69, %v68
    %v73 = vpack.c.bf16 %v71, %v70
    %v74 = vld [vmem:[%s7] sm:$0xf]
    %v75 = vld [vmem:[%s7 + $0x4] sm:$0xf]
    %v76 = vld [vmem:[%s7 + $0x8] sm:$0xf]
    %v77 = vld [vmem:[%s7 + $0xc] sm:$0xf]
    %v78 = vld [vmem:[%s7 + $0x10] sm:$0xf]
    %v79 = vld [vmem:[%s7 + $0x14] sm:$0xf]
    %v80 = vld [vmem:[%s7 + $0x18] sm:$0xf]
    %v81 = vld [vmem:[%s7 + $0x1c] sm:$0xf]
    %v82 = vld [vmem:[%s8] sm:$0x1]
    %v84 = vlaneseq
    %v85 = vshrl.u32 %v84, 7
    %v86 = vsub.s32 0, %v85
    %v87 = vrot.slane %v82, %v86
    %v97 = vunpack.c.l.b16 %v74
    %v98 = vunpack.c.l.b16 %v75
    %v99 = vunpack.c.l.b16 %v76
    %v100 = vunpack.c.l.b16 %v77
    %v101 = vunpack.c.l.b16 %v78
    %v102 = vunpack.c.l.b16 %v79
    %v103 = vunpack.c.l.b16 %v80
    %v104 = vunpack.c.l.b16 %v81
    %v105 = vpack.c.b16 %v98, %v97
    %v106 = vpack.c.b16 %v100, %v99
    %v107 = vpack.c.b16 %v102, %v101
    %v108 = vpack.c.b16 %v104, %v103
    %vm113 = vcmask 523264
    %v115 = vsel %vm113, %v72, 0
    %v118 = vsel %vm113, %v73, 0
    %120 = vmatprep.subr.bf16.mxu0 0
    %121 = vmatpush1.bf16.msra.mxu0 %v105
    %122 = vmatprep.subr.bf16.mxu0 0
    %123 = vmatpush1.bf16.msra.mxu0 %v106
    %124 = vmatprep.subr.bf16.mxu0 0
    %125 = vmatpush1.bf16.msra.mxu0 %v107
    %126 = vmatprep.subr.bf16.mxu0 0
    %127 = vmatpush1.bf16.msra.mxu0 %v108
    %128 = vmatprep.subr.bf16.mxu0 0
    %129 = vmatpush1.bf16.msra.mxu0 0
    %130 = vmatprep.subr.bf16.mxu0 0
    %131 = vmatpush1.bf16.msra.mxu0 0
    %132 = vmatprep.subr.bf16.mxu0 0
    %133 = vmatpush1.bf16.msra.mxu0 0
    %134 = vmatprep.subr.bf16.mxu0 0
    %135 = vmatpush1.bf16.msra.mxu0 0
    %136 = vmatprep.subr.bf16.mxu0 0
    %137 = vmatpush1.bf16.msra.mxu0 0
    %138 = vmatprep.subr.bf16.mxu0 0
    %139 = vmatpush1.bf16.msra.mxu0 0
    %140 = vmatprep.subr.bf16.mxu0 0
    %141 = vmatpush1.bf16.msra.mxu0 0
    %142 = vmatprep.subr.bf16.mxu0 0
    %143 = vmatpush1.bf16.msra.mxu0 0
    %144 = vmatprep.subr.bf16.mxu0 0
    %145 = vmatpush1.bf16.msra.mxu0 0
    %146 = vmatprep.subr.bf16.mxu0 0
    %147 = vmatpush1.bf16.msra.mxu0 0
    %148 = vmatprep.subr.bf16.mxu0 0
    %149 = vmatpush1.bf16.msra.mxu0 0
    %150 = vmatprep.subr.bf16.mxu0 0
    %151 = vmatpush1.bf16.msra.mxu0 0
    %152 = vmatprep.mubr.bf16.mxu0 0
    %153 = vmatmul.mubr.bf16.gmra.mrb[0].mxu0 %v115
    %v154 = vpop.f32.mrb[0].mxu0
    %v155 = vadd.f32 %v87, %v154
    %v156 = vpop.f32.mrb[0].mxu0
    %v157 = vpop.f32.mrb[0].mxu0
    %v158 = vadd.f32 %v87, %v157
    %v159 = vpop.f32.mrb[0].mxu0
    %160 = vmatprep.mubr.bf16.mxu0 0
    %161 = vmatmul.mubr.bf16.gmra.mrb[0].mxu0 %v118
    %v162 = vpop.f32.mrb[0].mxu0
    %v163 = vadd.f32 %v87, %v162
    %v164 = vpop.f32.mrb[0].mxu0
    %v165 = vpop.f32.mrb[0].mxu0
    %v166 = vadd.f32 %v87, %v165
    %v167 = vpop.f32.mrb[0].mxu0
    %168 = vdwg.mxu0
    %169 = vst [vmem:[#allocation8] sm:$0xff] %v155
    %170 = vst [vmem:[#allocation8 + $0x8] sm:$0xff] %v158
    %171 = vst [vmem:[#allocation8 + $0x10] sm:$0xff] %v163
    %172 = vst [vmem:[#allocation8 + $0x18] sm:$0xff] %v166
    %v173 = vld [vmem:[#allocation3] sm:$0xff]
    %v174 = vld [vmem:[#allocation3 + $0x8] sm:$0xff]
    %v175 = vld [vmem:[#allocation3 + $0x18] sm:$0xff]
    %v176 = vld [vmem:[#allocation3 + $0x20] sm:$0xff]
    %v177 = vld [vmem:[#allocation3 + $0x1] sm:$0xff]
    %v178 = vld [vmem:[#allocation3 + $0x9] sm:$0xff]
    %v179 = vld [vmem:[#allocation3 + $0x19] sm:$0xff]
    %v180 = vld [vmem:[#allocation3 + $0x21] sm:$0xff]
    %v181 = vld [vmem:[#allocation3 + $0x2] sm:$0xff]
    %v182 = vld [vmem:[#allocation3 + $0xa] sm:$0xff]
    %v183 = vld [vmem:[#allocation3 + $0x1a] sm:$0xff]
    %v184 = vld [vmem:[#allocation3 + $0x22] sm:$0xff]
    %189 = vrot.lane.b32.xlu0 %v177, 64
    %v190 = vpop.permute.xlu0 %189
    %191 = vrot.lane.b32.xlu0 %v178, 64
    %v192 = vpop.permute.xlu0 %191
    %193 = vrot.lane.b32.xlu0 %v179, 64
    %v194 = vpop.permute.xlu0 %193
    %195 = vrot.lane.b32.xlu0 %v180, 64
    %v196 = vpop.permute.xlu0 %195
    %v201 = vsel %vm113, %v173, %v190
    %v202 = vsel %vm113, %v174, %v192
    %v203 = vsel %vm113, %v175, %v194
    %v204 = vsel %vm113, %v176, %v196
    %v205 = vpack.c.bf16 %v202, %v201
    %v206 = vpack.c.bf16 %v182, %v181
    %v207 = vpack.c.bf16 %v204, %v203
    %v208 = vpack.c.bf16 %v184, %v183
    %v209 = vld [vmem:[%s1] sm:$0xf]
    %v210 = vld [vmem:[%s1 + $0x4] sm:$0xf]
    %v211 = vld [vmem:[%s1 + $0x8] sm:$0xf]
    %v212 = vld [vmem:[%s1 + $0xc] sm:$0xf]
    %v213 = vld [vmem:[%s1 + $0x10] sm:$0xf]
    %v214 = vld [vmem:[%s1 + $0x14] sm:$0xf]
    %v215 = vld [vmem:[%s1 + $0x18] sm:$0xf]
    %v216 = vld [vmem:[%s1 + $0x1c] sm:$0xf]
    %v217 = vld [vmem:[%s1 + $0x20] sm:$0xf]
    %v218 = vld [vmem:[%s1 + $0x24] sm:$0xf]
    %v219 = vld [vmem:[%s1 + $0x28] sm:$0xf]
    %v220 = vld [vmem:[%s1 + $0x2c] sm:$0xf]
    %v221 = vld [vmem:[%s1 + $0x30] sm:$0xf]
    %v222 = vld [vmem:[%s1 + $0x34] sm:$0xf]
    %v223 = vld [vmem:[%s1 + $0x38] sm:$0xf]
    %v224 = vld [vmem:[%s1 + $0x3c] sm:$0xf]
    %v225 = vld [vmem:[%s1 + $0x40] sm:$0xf]
    %v226 = vld [vmem:[%s1 + $0x44] sm:$0xf]
    %v227 = vld [vmem:[%s1 + $0x48] sm:$0xf]
    %v228 = vld [vmem:[%s1 + $0x4c] sm:$0xf]
    %v229 = vld [vmem:[%s1 + $0x50] sm:$0xf]
    %v230 = vld [vmem:[%s1 + $0x54] sm:$0xf]
    %v231 = vld [vmem:[%s1 + $0x58] sm:$0xf]
    %v232 = vld [vmem:[%s1 + $0x5c] sm:$0xf]
    %v257 = vunpack.c.l.b16 %v209
    %v258 = vunpack.c.l.b16 %v210
    %v259 = vunpack.c.l.b16 %v211
    %v260 = vunpack.c.l.b16 %v212
    %v261 = vunpack.c.l.b16 %v213
    %v262 = vunpack.c.l.b16 %v214
    %v263 = vunpack.c.l.b16 %v215
    %v264 = vunpack.c.l.b16 %v216
    %v265 = vunpack.c.l.b16 %v217
    %v266 = vunpack.c.l.b16 %v218
    %v267 = vunpack.c.l.b16 %v219
    %v268 = vunpack.c.l.b16 %v220
    %v269 = vunpack.c.l.b16 %v221
    %v270 = vunpack.c.l.b16 %v222
    %v271 = vunpack.c.l.b16 %v223
    %v272 = vunpack.c.l.b16 %v224
    %v273 = vunpack.c.l.b16 %v225
    %v274 = vunpack.c.l.b16 %v226
    %v275 = vunpack.c.l.b16 %v227
    %v276 = vunpack.c.l.b16 %v228
    %v277 = vunpack.c.l.b16 %v229
    %v278 = vunpack.c.l.b16 %v230
    %v279 = vunpack.c.l.b16 %v231
    %v280 = vunpack.c.l.b16 %v232
    %v281 = vpack.c.b16 %v258, %v257
    %v282 = vpack.c.b16 %v260, %v259
    %v283 = vpack.c.b16 %v262, %v261
    %v284 = vpack.c.b16 %v264, %v263
    %v285 = vpack.c.b16 %v266, %v265
    %v286 = vpack.c.b16 %v268, %v267
    %v287 = vpack.c.b16 %v270, %v269
    %v288 = vpack.c.b16 %v272, %v271
    %v289 = vpack.c.b16 %v274, %v273
    %v290 = vpack.c.b16 %v276, %v275
    %v291 = vpack.c.b16 %v278, %v277
    %v292 = vpack.c.b16 %v280, %v279
    %v306 = vsel %vm113, %v206, 0
    %v309 = vsel %vm113, %v208, 0
    %311 = vmatprep.subr.bf16.mxu0 0
    %312 = vmatpush1.bf16.msra.mxu0 %v281
    %313 = vmatprep.subr.bf16.mxu0 0
    %314 = vmatpush1.bf16.msra.mxu0 %v282
    %315 = vmatprep.subr.bf16.mxu0 0
    %316 = vmatpush1.bf16.msra.mxu0 %v283
    %317 = vmatprep.subr.bf16.mxu0 0
    %318 = vmatpush1.bf16.msra.mxu0 %v284
    %319 = vmatprep.subr.bf16.mxu0 0
    %320 = vmatpush1.bf16.msra.mxu0 %v285
    %321 = vmatprep.subr.bf16.mxu0 0
    %322 = vmatpush1.bf16.msra.mxu0 %v286
    %323 = vmatprep.subr.bf16.mxu0 0
    %324 = vmatpush1.bf16.msra.mxu0 %v287
    %325 = vmatprep.subr.bf16.mxu0 0
    %326 = vmatpush1.bf16.msra.mxu0 %v288
    %327 = vmatprep.subr.bf16.mxu0 0
    %328 = vmatpush1.bf16.msra.mxu0 %v289
    %329 = vmatprep.subr.bf16.mxu0 0
    %330 = vmatpush1.bf16.msra.mxu0 %v290
    %331 = vmatprep.subr.bf16.mxu0 0
    %332 = vmatpush1.bf16.msra.mxu0 %v291
    %333 = vmatprep.subr.bf16.mxu0 0
    %334 = vmatpush1.bf16.msra.mxu0 %v292
    %335 = vmatprep.subr.bf16.mxu0 0
    %336 = vmatpush1.bf16.msra.mxu0 0
    %337 = vmatprep.subr.bf16.mxu0 0
    %338 = vmatpush1.bf16.msra.mxu0 0
    %339 = vmatprep.subr.bf16.mxu0 0
    %340 = vmatpush1.bf16.msra.mxu0 0
    %341 = vmatprep.subr.bf16.mxu0 0
    %342 = vmatpush1.bf16.msra.mxu0 0
    %343 = vmatprep.mubr.bf16.mxu0 %v306
    %344 = vmatmul.mubr.bf16.gmra.mrb[0].mxu0 %v205
    %v345 = vpop.f32.mrb[0].mxu0
    %v346 = vadd.f32 0.0, %v345
    %v347 = vpop.f32.mrb[0].mxu0
    %v348 = vpop.f32.mrb[0].mxu0
    %v349 = vadd.f32 0.0, %v348
    %v350 = vpop.f32.mrb[0].mxu0
    %351 = vmatprep.mubr.bf16.mxu0 %v309
    %352 = vmatmul.mubr.bf16.gmra.mrb[0].mxu0 %v207
    %v353 = vpop.f32.mrb[0].mxu0
    %v354 = vadd.f32 0.0, %v353
    %v355 = vpop.f32.mrb[0].mxu0
    %v356 = vpop.f32.mrb[0].mxu0
    %v357 = vadd.f32 0.0, %v356
    %v358 = vpop.f32.mrb[0].mxu0
    %359 = vdwg.mxu0
    %v360 = vadd.f32 %v346, %v349
    %v361 = vadd.f32 %v360, %v354
    %v362 = vadd.f32 %v361, %v357
    %v363 = vrot.slane %v362, 4
    %v364 = vadd.f32 %v362, %v363
    %v365 = vrot.slane %v364, 2
    %v366 = vadd.f32 %v364, %v365
    %v367 = vrot.slane %v366, 1
    %v368 = vadd.f32 %v366, %v367
    %v369 = vmul.f32 %v346, %v346
    %v370 = vmul.f32 %v349, %v349
    %v371 = vmul.f32 %v354, %v354
    %v372 = vmul.f32 %v357, %v357
    %v373 = vadd.f32 %v369, %v370
    %v374 = vadd.f32 %v373, %v371
    %v375 = vadd.f32 %v374, %v372
    %v376 = vrot.slane %v375, 4
    %v377 = vadd.f32 %v375, %v376
    %v378 = vrot.slane %v377, 2
    %v379 = vadd.f32 %v377, %v378
    %v380 = vrot.slane %v379, 1
    %v381 = vadd.f32 %v379, %v380
    %vm382 = vcmask 1040384
    %v383 = vsel %vm382, %v368, %v381
    %v384 = vld [vmem:[%s9] sm:$0xff]
    %v385 = vld [vmem:[%s9 + $0x8] sm:$0xff]
    %v386 = vld [vmem:[%s9 + $0x10] sm:$0xff]
    %v387 = vld [vmem:[%s9 + $0x18] sm:$0xff]
    %v388 = vld [vmem:[%s9 + $0x20] sm:$0xff]
    %v389 = vld [vmem:[%s9 + $0x28] sm:$0xff]
    %v390 = vld [vmem:[%s9 + $0x30] sm:$0xff]
    %v391 = vld [vmem:[%s9 + $0x38] sm:$0xff]
    %v392 = vld [vmem:[%s9 + $0x40] sm:$0xff]
    %v393 = vld [vmem:[%s9 + $0x48] sm:$0xff]
    %v394 = vld [vmem:[%s9 + $0x50] sm:$0xff]
    %v395 = vld [vmem:[%s9 + $0x58] sm:$0xff]
    %v396 = vld [vmem:[%s9 + $0x60] sm:$0xff]
    %v397 = vld [vmem:[%s9 + $0x68] sm:$0xff]
    %v398 = vld [vmem:[%s9 + $0x70] sm:$0xff]
    %v399 = vld [vmem:[%s9 + $0x78] sm:$0xff]
    %400 = vmatprep.subr.mxu0 0.0
    %401 = vmatpush1.msra.mxu0 %v384
    %402 = vmatprep.subr.mxu0 0.0
    %403 = vmatpush1.msra.mxu0 %v385
    %404 = vmatprep.subr.mxu0 0.0
    %405 = vmatpush1.msra.mxu0 %v386
    %406 = vmatprep.subr.mxu0 0.0
    %407 = vmatpush1.msra.mxu0 %v387
    %408 = vmatprep.subr.mxu0 0.0
    %409 = vmatpush1.msra.mxu0 %v388
    %410 = vmatprep.subr.mxu0 0.0
    %411 = vmatpush1.msra.mxu0 %v389
    %412 = vmatprep.subr.mxu0 0.0
    %413 = vmatpush1.msra.mxu0 %v390
    %414 = vmatprep.subr.mxu0 0.0
    %415 = vmatpush1.msra.mxu0 %v391
    %416 = vmatprep.subr.mxu0 0.0
    %417 = vmatpush1.msra.mxu0 %v392
    %418 = vmatprep.subr.mxu0 0.0
    %419 = vmatpush1.msra.mxu0 %v393
    %420 = vmatprep.subr.mxu0 0.0
    %421 = vmatpush1.msra.mxu0 %v394
    %422 = vmatprep.subr.mxu0 0.0
    %423 = vmatpush1.msra.mxu0 %v395
    %424 = vmatprep.subr.mxu0 0.0
    %425 = vmatpush1.msra.mxu0 %v396
    %426 = vmatprep.subr.mxu0 0.0
    %427 = vmatpush1.msra.mxu0 %v397
    %428 = vmatprep.subr.mxu0 0.0
    %429 = vmatpush1.msra.mxu0 %v398
    %430 = vmatprep.subr.mxu0 0.0
    %431 = vmatpush1.msra.mxu0 %v399
    %432 = vmatprep.subr.mxu0 0.0
    %433 = vmatpush1.msra.mxu0 0.0
    %434 = vmatprep.subr.mxu0 0.0
    %435 = vmatpush1.msra.mxu0 0.0
    %436 = vmatprep.subr.mxu0 0.0
    %437 = vmatpush1.msra.mxu0 0.0
    %438 = vmatprep.subr.mxu0 0.0
    %439 = vmatpush1.msra.mxu0 0.0
    %440 = vmatprep.subr.mxu0 0.0
    %441 = vmatpush1.msra.mxu0 0.0
    %442 = vmatprep.subr.mxu0 0.0
    %443 = vmatpush1.msra.mxu0 0.0
    %444 = vmatprep.subr.mxu0 0.0
    %445 = vmatpush1.msra.mxu0 0.0
    %446 = vmatprep.subr.mxu0 0.0
    %447 = vmatpush1.msra.mxu0 0.0
    %448 = vmatprep.subr.mxu0 0.0
    %449 = vmatpush1.msra.mxu0 0.0
    %450 = vmatprep.subr.mxu0 0.0
    %451 = vmatpush1.msra.mxu0 0.0
    %452 = vmatprep.subr.mxu0 0.0
    %453 = vmatpush1.msra.mxu0 0.0
    %454 = vmatprep.subr.mxu0 0.0
    %455 = vmatpush1.msra.mxu0 0.0
    %456 = vmatprep.subr.mxu0 0.0
    %457 = vmatpush1.msra.mxu0 0.0
    %458 = vmatprep.subr.mxu0 0.0
    %459 = vmatpush1.msra.mxu0 0.0
    %460 = vmatprep.subr.mxu0 0.0
    %461 = vmatpush1.msra.mxu0 0.0
    %462 = vmatprep.subr.mxu0 0.0
    %463 = vmatpush1.msra.mxu0 0.0
    %464 = vmatprep.mubr.f32.mxu0 0.0
    %465 = vmatmul.mubr.f32.gmra.mrb[0].mxu0 %v383
    %v466 = vpop.f32.mrb[0].mxu0
    %v467 = vadd.f32 0.0, %v466
    %v468 = vpop.f32.mrb[0].mxu0
    %469 = vdwg.mxu0
    %v470 = vrcp.pop 512.0
    %v471 = vmul.f32 %v467, %v470
    %v472 = vmul.f32 %v471, %v471
    %v474 = vrot.slane %v472, 7
    %v476 = vsub.f32 %v471, %v474
    %v477 = vld [vmem:[%s2] sm:$0x1]
    %v478 = vadd.f32 %v476, 1e-05
    %v479 = vrsqrt.pop %v478
    %v482 = vunpack.c.l.s4 1966171168
    %v483 = vunpack.c.0.s8 %v482
    %v484 = vlaneseq
    %v485 = vshrl.u32 %v484, 7
    %v486 = vsub.s32 %v483, %v485
    %v487 = vrot.slane %v479, %v486
    %v488 = vcombine.high %v487, %v487
    %v490 = vunpack.c.l.s4 1966171168
    %v491 = vunpack.c.0.s8 %v490
    %v492 = vlaneseq
    %v493 = vshrl.u32 %v492, 7
    %v494 = vsub.s32 %v491, %v493
    %v495 = vrot.slane %v488, %v494
    %v497 = vmul.f32 %v477, %v495
    %v498 = vld [vmem:[%s3] sm:$0x1]
    %v499 = vmul.f32 %v471, %v497
    %v500 = vsub.f32 %v498, %v499
    %v502 = vlaneseq
    %v503 = vshrl.u32 %v502, 7
    %v504 = vsub.s32 0, %v503
    %v505 = vrot.slane %v500, %v504
    %v507 = vsel %vm382, %v497, %v505
    %v508 = vld [vmem:[%s10] sm:$0xff]
    %vm509 = vcmask 64512
    %v511 = vsel %vm509, %v507, 0
    %513 = vmatprep.subr.mxu0 0.0
    %514 = vmatpush1.msra.mxu0 %v508
    %515 = vmatprep.subr.mxu0 0.0
    %516 = vmatpush1.msra.mxu0 0.0
    %517 = vmatprep.subr.mxu0 0.0
    %518 = vmatpush1.msra.mxu0 0.0
    %519 = vmatprep.subr.mxu0 0.0
    %520 = vmatpush1.msra.mxu0 0.0
    %521 = vmatprep.subr.mxu0 0.0
    %522 = vmatpush1.msra.mxu0 0.0
    %523 = vmatprep.subr.mxu0 0.0
    %524 = vmatpush1.msra.mxu0 0.0
    %525 = vmatprep.subr.mxu0 0.0
    %526 = vmatpush1.msra.mxu0 0.0
    %527 = vmatprep.subr.mxu0 0.0
    %528 = vmatpush1.msra.mxu0 0.0
    %529 = vmatprep.subr.mxu0 0.0
    %530 = vmatpush1.msra.mxu0 0.0
    %531 = vmatprep.subr.mxu0 0.0
    %532 = vmatpush1.msra.mxu0 0.0
    %533 = vmatprep.subr.mxu0 0.0
    %534 = vmatpush1.msra.mxu0 0.0
    %535 = vmatprep.subr.mxu0 0.0
    %536 = vmatpush1.msra.mxu0 0.0
    %537 = vmatprep.subr.mxu0 0.0
    %538 = vmatpush1.msra.mxu0 0.0
    %539 = vmatprep.subr.mxu0 0.0
    %540 = vmatpush1.msra.mxu0 0.0
    %541 = vmatprep.subr.mxu0 0.0
    %542 = vmatpush1.msra.mxu0 0.0
    %543 = vmatprep.subr.mxu0 0.0
    %544 = vmatpush1.msra.mxu0 0.0
    %545 = vmatprep.subr.mxu0 0.0
    %546 = vmatpush1.msra.mxu0 0.0
    %547 = vmatprep.subr.mxu0 0.0
    %548 = vmatpush1.msra.mxu0 0.0
    %549 = vmatprep.subr.mxu0 0.0
    %550 = vmatpush1.msra.mxu0 0.0
    %551 = vmatprep.subr.mxu0 0.0
    %552 = vmatpush1.msra.mxu0 0.0
    %553 = vmatprep.subr.mxu0 0.0
    %554 = vmatpush1.msra.mxu0 0.0
    %555 = vmatprep.subr.mxu0 0.0
    %556 = vmatpush1.msra.mxu0 0.0
    %557 = vmatprep.subr.mxu0 0.0
    %558 = vmatpush1.msra.mxu0 0.0
    %559 = vmatprep.subr.mxu0 0.0
    %560 = vmatpush1.msra.mxu0 0.0
    %561 = vmatprep.subr.mxu0 0.0
    %562 = vmatpush1.msra.mxu0 0.0
    %563 = vmatprep.subr.mxu0 0.0
    %564 = vmatpush1.msra.mxu0 0.0
    %565 = vmatprep.subr.mxu0 0.0
    %566 = vmatpush1.msra.mxu0 0.0
    %567 = vmatprep.subr.mxu0 0.0
    %568 = vmatpush1.msra.mxu0 0.0
    %569 = vmatprep.subr.mxu0 0.0
    %570 = vmatpush1.msra.mxu0 0.0
    %571 = vmatprep.subr.mxu0 0.0
    %572 = vmatpush1.msra.mxu0 0.0
    %573 = vmatprep.subr.mxu0 0.0
    %574 = vmatpush1.msra.mxu0 0.0
    %575 = vmatprep.subr.mxu0 0.0
    %576 = vmatpush1.msra.mxu0 0.0
    %577 = vmatprep.mubr.f32.mxu0 0.0
    %578 = vmatmul.mubr.f32.gmra.mrb[0].mxu0 %v511
    %v579 = vpop.f32.mrb[0].mxu0
    %v580 = vadd.f32 0.0, %v579
    %v581 = vpop.f32.mrb[0].mxu0
    %582 = vdwg.mxu0
    %v583 = vlaneseq
    %v584 = vshrl.u32 %v583, 7
    %v585 = vsub.s32 0, %v584
    %v586 = vrot.slane %v580, %v585
    %v587 = vmul.f32 %v346, %v586
    %v588 = vmul.f32 %v349, %v586
    %v589 = vmul.f32 %v354, %v586
    %v590 = vmul.f32 %v357, %v586
    %v591 = vlaneseq
    %v592 = vshrl.u32 %v591, 7
    %v593 = vsub.s32 1, %v592
    %v594 = vrot.slane %v580, %v593
    %v595 = vadd.f32 %v587, %v594
    %v596 = vadd.f32 %v588, %v594
    %v597 = vadd.f32 %v589, %v594
    %v598 = vadd.f32 %v590, %v594
    %v599 = vmax.f32 %v595, 0.0
    %v600 = vmax.f32 %v596, 0.0
    %v601 = vmax.f32 %v597, 0.0
    %v602 = vmax.f32 %v598, 0.0
    %603 = vst [vmem:[#allocation2 + $0x7] sm:$0x1] 0.0
    %604 = vst [vmem:[#allocation2 + $0x27] sm:$0x1] 0.0
    %605 = vst [vmem:[#allocation2 + $0x18] sm:$0x1] 0.0
    %606 = vst [vmem:[#allocation2 + $0x38] sm:$0x1] 0.0
    %607 = vst [vmem:[#allocation2 + $0x8] sm:$0xff] %v599
    %608 = vst [vmem:[#allocation2 + $0x10] sm:$0xff] %v600
    %609 = vst [vmem:[#allocation2 + $0x28] sm:$0xff] %v601
    %610 = vst [vmem:[#allocation2 + $0x30] sm:$0xff] %v602
    %v611 = vld [vmem:[#allocation2 + $0x7] sm:$0xff]
    %v612 = vld [vmem:[#allocation2 + $0xf] sm:$0xff]
    %v613 = vld [vmem:[#allocation2 + $0x27] sm:$0xff]
    %v614 = vld [vmem:[#allocation2 + $0x2f] sm:$0xff]
    %v615 = vld [vmem:[#allocation2 + $0x8] sm:$0xff]
    %v616 = vld [vmem:[#allocation2 + $0x10] sm:$0xff]
    %v617 = vld [vmem:[#allocation2 + $0x28] sm:$0xff]
    %v618 = vld [vmem:[#allocation2 + $0x30] sm:$0xff]
    %v619 = vld [vmem:[#allocation2 + $0x9] sm:$0xff]
    %v620 = vld [vmem:[#allocation2 + $0x11] sm:$0xff]
    %v621 = vld [vmem:[#allocation2 + $0x29] sm:$0xff]
    %v622 = vld [vmem:[#allocation2 + $0x31] sm:$0xff]
    %v623 = vpack.c.bf16 %v612, %v611
    %v624 = vpack.c.bf16 %v616, %v615
    %v625 = vpack.c.bf16 %v620, %v619
    %v626 = vpack.c.bf16 %v614, %v613
    %v627 = vpack.c.bf16 %v618, %v617
    %v628 = vpack.c.bf16 %v622, %v621
    %v629 = vld [vmem:[#allocation6] sm:$0xf]
    %v630 = vld [vmem:[#allocation6 + $0x4] sm:$0xf]
    %v631 = vld [vmem:[#allocation6 + $0x8] sm:$0xf]
    %v632 = vld [vmem:[#allocation6 + $0xc] sm:$0xf]
    %v633 = vld [vmem:[#allocation6 + $0x10] sm:$0xf]
    %v634 = vld [vmem:[#allocation6 + $0x14] sm:$0xf]
    %v635 = vld [vmem:[#allocation6 + $0x18] sm:$0xf]
    %v636 = vld [vmem:[#allocation6 + $0x1c] sm:$0xf]
    %v637 = vld [vmem:[#allocation6 + $0x20] sm:$0xf]
    %v638 = vld [vmem:[#allocation6 + $0x24] sm:$0xf]
    %v639 = vld [vmem:[#allocation6 + $0x28] sm:$0xf]
    %v640 = vld [vmem:[#allocation6 + $0x2c] sm:$0xf]
    %v641 = vld [vmem:[#allocation6 + $0x30] sm:$0xf]
    %v642 = vld [vmem:[#allocation6 + $0x34] sm:$0xf]
    %v643 = vld [vmem:[#allocation6 + $0x38] sm:$0xf]
    %v644 = vld [vmem:[#allocation6 + $0x3c] sm:$0xf]
    %v645 = vld [vmem:[#allocation6 + $0x40] sm:$0xf]
    %v646 = vld [vmem:[#allocation6 + $0x44] sm:$0xf]
    %v647 = vld [vmem:[#allocation6 + $0x48] sm:$0xf]
    %v648 = vld [vmem:[#allocation6 + $0x4c] sm:$0xf]
    %v649 = vld [vmem:[#allocation6 + $0x50] sm:$0xf]
    %v650 = vld [vmem:[#allocation6 + $0x54] sm:$0xf]
    %v651 = vld [vmem:[#allocation6 + $0x58] sm:$0xf]
    %v652 = vld [vmem:[#allocation6 + $0x5c] sm:$0xf]
    %v653 = vld [vmem:[#allocation6 + $0x60] sm:$0xf]
    %v654 = vld [vmem:[#allocation6 + $0x64] sm:$0xf]
    %v655 = vld [vmem:[#allocation6 + $0x68] sm:$0xf]
    %v656 = vld [vmem:[#allocation6 + $0x6c] sm:$0xf]
    %v657 = vld [vmem:[#allocation6 + $0x70] sm:$0xf]
    %v658 = vld [vmem:[#allocation6 + $0x74] sm:$0xf]
    %v659 = vld [vmem:[#allocation6 + $0x78] sm:$0xf]
    %v660 = vld [vmem:[#allocation6 + $0x7c] sm:$0xf]
    %v661 = vld [vmem:[#allocation6 + $0x80] sm:$0xf]
    %v662 = vld [vmem:[#allocation6 + $0x84] sm:$0xf]
    %v663 = vld [vmem:[#allocation6 + $0x88] sm:$0xf]
    %v664 = vld [vmem:[#allocation6 + $0x8c] sm:$0xf]
    %v665 = vld [vmem:[#allocation6 + $0x90] sm:$0xf]
    %v666 = vld [vmem:[#allocation6 + $0x94] sm:$0xf]
    %v667 = vld [vmem:[#allocation6 + $0x98] sm:$0xf]
    %v668 = vld [vmem:[#allocation6 + $0x9c] sm:$0xf]
    %v669 = vld [vmem:[#allocation6 + $0xa0] sm:$0xf]
    %v670 = vld [vmem:[#allocation6 + $0xa4] sm:$0xf]
    %v671 = vld [vmem:[#allocation6 + $0xa8] sm:$0xf]
    %v672 = vld [vmem:[#allocation6 + $0xac] sm:$0xf]
    %v673 = vld [vmem:[#allocation6 + $0xb0] sm:$0xf]
    %v674 = vld [vmem:[#allocation6 + $0xb4] sm:$0xf]
    %v675 = vld [vmem:[#allocation6 + $0xb8] sm:$0xf]
    %v676 = vld [vmem:[#allocation6 + $0xbc] sm:$0xf]
    %v725 = vunpack.c.l.b16 %v629
    %v726 = vunpack.c.l.b16 %v630
    %v727 = vunpack.c.l.b16 %v631
    %v728 = vunpack.c.l.b16 %v632
    %v729 = vunpack.c.l.b16 %v633
    %v730 = vunpack.c.l.b16 %v634
    %v731 = vunpack.c.l.b16 %v635
    %v732 = vunpack.c.l.b16 %v636
    %v733 = vunpack.c.l.b16 %v637
    %v734 = vunpack.c.l.b16 %v638
    %v735 = vunpack.c.l.b16 %v639
    %v736 = vunpack.c.l.b16 %v640
    %v737 = vunpack.c.l.b16 %v641
    %v738 = vunpack.c.l.b16 %v642
    %v739 = vunpack.c.l.b16 %v643
    %v740 = vunpack.c.l.b16 %v644
    %v741 = vunpack.c.l.b16 %v645
    %v742 = vunpack.c.l.b16 %v646
    %v743 = vunpack.c.l.b16 %v647
    %v744 = vunpack.c.l.b16 %v648
    %v745 = vunpack.c.l.b16 %v649
    %v746 = vunpack.c.l.b16 %v650
    %v747 = vunpack.c.l.b16 %v651
    %v748 = vunpack.c.l.b16 %v652
    %v749 = vunpack.c.l.b16 %v653
    %v750 = vunpack.c.l.b16 %v654
    %v751 = vunpack.c.l.b16 %v655
    %v752 = vunpack.c.l.b16 %v656
    %v753 = vunpack.c.l.b16 %v657
    %v754 = vunpack.c.l.b16 %v658
    %v755 = vunpack.c.l.b16 %v659
    %v756 = vunpack.c.l.b16 %v660
    %v757 = vunpack.c.l.b16 %v661
    %v758 = vunpack.c.l.b16 %v662
    %v759 = vunpack.c.l.b16 %v663
    %v760 = vunpack.c.l.b16 %v664
    %v761 = vunpack.c.l.b16 %v665
    %v762 = vunpack.c.l.b16 %v666
    %v763 = vunpack.c.l.b16 %v667
    %v764 = vunpack.c.l.b16 %v668
    %v765 = vunpack.c.l.b16 %v669
    %v766 = vunpack.c.l.b16 %v670
    %v767 = vunpack.c.l.b16 %v671
    %v768 = vunpack.c.l.b16 %v672
    %v769 = vunpack.c.l.b16 %v673
    %v770 = vunpack.c.l.b16 %v674
    %v771 = vunpack.c.l.b16 %v675
    %v772 = vunpack.c.l.b16 %v676
    %v773 = vpack.c.b16 %v726, %v725
    %v774 = vpack.c.b16 %v728, %v727
    %v775 = vpack.c.b16 %v730, %v729
    %v776 = vpack.c.b16 %v732, %v731
    %v777 = vpack.c.b16 %v734, %v733
    %v778 = vpack.c.b16 %v736, %v735
    %v779 = vpack.c.b16 %v738, %v737
    %v780 = vpack.c.b16 %v740, %v739
    %v781 = vpack.c.b16 %v742, %v741
    %v782 = vpack.c.b16 %v744, %v743
    %v783 = vpack.c.b16 %v746, %v745
    %v784 = vpack.c.b16 %v748, %v747
    %v785 = vpack.c.b16 %v750, %v749
    %v786 = vpack.c.b16 %v752, %v751
    %v787 = vpack.c.b16 %v754, %v753
    %v788 = vpack.c.b16 %v756, %v755
    %v789 = vpack.c.b16 %v758, %v757
    %v790 = vpack.c.b16 %v760, %v759
    %v791 = vpack.c.b16 %v762, %v761
    %v792 = vpack.c.b16 %v764, %v763
    %v793 = vpack.c.b16 %v766, %v765
    %v794 = vpack.c.b16 %v768, %v767
    %v795 = vpack.c.b16 %v770, %v769
    %v796 = vpack.c.b16 %v772, %v771
    %821 = vmatprep.subr.bf16.mxu0 0
    %822 = vmatpush1.bf16.msra.mxu0 %v773
    %823 = vmatprep.subr.bf16.mxu0 0
    %824 = vmatpush1.bf16.msra.mxu0 %v774
    %825 = vmatprep.subr.bf16.mxu0 0
    %826 = vmatpush1.bf16.msra.mxu0 %v775
    %827 = vmatprep.subr.bf16.mxu0 0
    %828 = vmatpush1.bf16.msra.mxu0 %v776
    %829 = vmatprep.subr.bf16.mxu0 0
    %830 = vmatpush1.bf16.msra.mxu0 %v777
    %831 = vmatprep.subr.bf16.mxu0 0
    %832 = vmatpush1.bf16.msra.mxu0 %v778
    %833 = vmatprep.subr.bf16.mxu0 0
    %834 = vmatpush1.bf16.msra.mxu0 %v779
    %835 = vmatprep.subr.bf16.mxu0 0
    %836 = vmatpush1.bf16.msra.mxu0 %v780
    %837 = vmatprep.subr.bf16.mxu0 0
    %838 = vmatpush1.bf16.msra.mxu0 %v781
    %839 = vmatprep.subr.bf16.mxu0 0
    %840 = vmatpush1.bf16.msra.mxu0 %v782
    %841 = vmatprep.subr.bf16.mxu0 0
    %842 = vmatpush1.bf16.msra.mxu0 %v783
    %843 = vmatprep.subr.bf16.mxu0 0
    %844 = vmatpush1.bf16.msra.mxu0 %v784
    %845 = vmatprep.subr.bf16.mxu0 0
    %846 = vmatpush1.bf16.msra.mxu0 %v785
    %847 = vmatprep.subr.bf16.mxu0 0
    %848 = vmatpush1.bf16.msra.mxu0 %v786
    %849 = vmatprep.subr.bf16.mxu0 0
    %850 = vmatpush1.bf16.msra.mxu0 %v787
    %851 = vmatprep.subr.bf16.mxu0 0
    %852 = vmatpush1.bf16.msra.mxu0 %v788
    %853 = vmatprep.mubr.bf16.mxu0 %v624
    %854 = vmatmul.mubr.bf16.gmra.mrb[0].mxu0 %v623
    %v855 = vpop.f32.mrb[0].mxu0
    %v856 = vadd.f32 0.0, %v855
    %v857 = vpop.f32.mrb[0].mxu0
    %v858 = vpop.f32.mrb[0].mxu0
    %v859 = vadd.f32 0.0, %v858
    %v860 = vpop.f32.mrb[0].mxu0
    %861 = vmatprep.mubr.bf16.mxu0 %v627
    %862 = vmatmul.mubr.bf16.gmra.mrb[0].mxu0 %v626
    %v863 = vpop.f32.mrb[0].mxu0
    %v864 = vadd.f32 0.0, %v863
    %v865 = vpop.f32.mrb[0].mxu0
    %v866 = vpop.f32.mrb[0].mxu0
    %v867 = vadd.f32 0.0, %v866
    %v868 = vpop.f32.mrb[0].mxu0
    %869 = vdwg.mxu0
    %870 = vmatprep.subr.bf16.mxu0 0
    %871 = vmatpush1.bf16.msra.mxu0 %v789
    %872 = vmatprep.subr.bf16.mxu0 0
    %873 = vmatpush1.bf16.msra.mxu0 %v790
    %874 = vmatprep.subr.bf16.mxu0 0
    %875 = vmatpush1.bf16.msra.mxu0 %v791
    %876 = vmatprep.subr.bf16.mxu0 0
    %877 = vmatpush1.bf16.msra.mxu0 %v792
    %878 = vmatprep.subr.bf16.mxu0 0
    %879 = vmatpush1.bf16.msra.mxu0 %v793
    %880 = vmatprep.subr.bf16.mxu0 0
    %881 = vmatpush1.bf16.msra.mxu0 %v794
    %882 = vmatprep.subr.bf16.mxu0 0
    %883 = vmatpush1.bf16.msra.mxu0 %v795
    %884 = vmatprep.subr.bf16.mxu0 0
    %885 = vmatpush1.bf16.msra.mxu0 %v796
    %886 = vmatprep.subr.bf16.mxu0 0
    %887 = vmatpush1.bf16.msra.mxu0 0
    %888 = vmatprep.subr.bf16.mxu0 0
    %889 = vmatpush1.bf16.msra.mxu0 0
    %890 = vmatprep.subr.bf16.mxu0 0
    %891 = vmatpush1.bf16.msra.mxu0 0
    %892 = vmatprep.subr.bf16.mxu0 0
    %893 = vmatpush1.bf16.msra.mxu0 0
    %894 = vmatprep.subr.bf16.mxu0 0
    %895 = vmatpush1.bf16.msra.mxu0 0
    %896 = vmatprep.subr.bf16.mxu0 0
    %897 = vmatpush1.bf16.msra.mxu0 0
    %898 = vmatprep.subr.bf16.mxu0 0
    %899 = vmatpush1.bf16.msra.mxu0 0
    %900 = vmatprep.subr.bf16.mxu0 0
    %901 = vmatpush1.bf16.msra.mxu0 0
    %902 = vmatprep.mubr.bf16.mxu0 0
    %903 = vmatmul.mubr.bf16.gmra.mrb[0].mxu0 %v625
    %v904 = vpop.f32.mrb[0].mxu0
    %v905 = vadd.f32 %v856, %v904
    %v906 = vpop.f32.mrb[0].mxu0
    %v907 = vpop.f32.mrb[0].mxu0
    %v908 = vadd.f32 %v859, %v907
    %v909 = vpop.f32.mrb[0].mxu0
    %910 = vmatprep.mubr.bf16.mxu0 0
    %911 = vmatmul.mubr.bf16.gmra.mrb[0].mxu0 %v628
    %v912 = vpop.f32.mrb[0].mxu0
    %v913 = vadd.f32 %v864, %v912
    %v914 = vpop.f32.mrb[0].mxu0
    %v915 = vpop.f32.mrb[0].mxu0
    %v916 = vadd.f32 %v867, %v915
    %v917 = vpop.f32.mrb[0].mxu0
    %918 = vdwg.mxu0
    %v919 = vadd.f32 %v905, %v908
    %v920 = vadd.f32 %v919, %v913
    %v921 = vadd.f32 %v920, %v916
    %v922 = vrot.slane %v921, 4
    %v923 = vadd.f32 %v921, %v922
    %v924 = vrot.slane %v923, 2
    %v925 = vadd.f32 %v923, %v924
    %v926 = vrot.slane %v925, 1
    %v927 = vadd.f32 %v925, %v926
    %v928 = vmul.f32 %v905, %v905
    %v929 = vmul.f32 %v908, %v908
    %v930 = vmul.f32 %v913, %v913
    %v931 = vmul.f32 %v916, %v916
    %v932 = vadd.f32 %v928, %v929
    %v933 = vadd.f32 %v932, %v930
    %v934 = vadd.f32 %v933, %v931
    %v935 = vrot.slane %v934, 4
    %v936 = vadd.f32 %v934, %v935
    %v937 = vrot.slane %v936, 2
    %v938 = vadd.f32 %v936, %v937
    %v939 = vrot.slane %v938, 1
    %v940 = vadd.f32 %v938, %v939
    %v941 = vsel %vm382, %v927, %v940
    %v942 = vld [vmem:[%s9] sm:$0xff]
    %v943 = vld [vmem:[%s9 + $0x8] sm:$0xff]
    %v944 = vld [vmem:[%s9 + $0x10] sm:$0xff]
    %v945 = vld [vmem:[%s9 + $0x18] sm:$0xff]
    %v946 = vld [vmem:[%s9 + $0x20] sm:$0xff]
    %v947 = vld [vmem:[%s9 + $0x28] sm:$0xff]
    %v948 = vld [vmem:[%s9 + $0x30] sm:$0xff]
    %v949 = vld [vmem:[%s9 + $0x38] sm:$0xff]
    %v950 = vld [vmem:[%s9 + $0x40] sm:$0xff]
    %v951 = vld [vmem:[%s9 + $0x48] sm:$0xff]
    %v952 = vld [vmem:[%s9 + $0x50] sm:$0xff]
    %v953 = vld [vmem:[%s9 + $0x58] sm:$0xff]
    %v954 = vld [vmem:[%s9 + $0x60] sm:$0xff]
    %v955 = vld [vmem:[%s9 + $0x68] sm:$0xff]
    %v956 = vld [vmem:[%s9 + $0x70] sm:$0xff]
    %v957 = vld [vmem:[%s9 + $0x78] sm:$0xff]
    %958 = vmatprep.subr.mxu0 0.0
    %959 = vmatpush1.msra.mxu0 %v942
    %960 = vmatprep.subr.mxu0 0.0
    %961 = vmatpush1.msra.mxu0 %v943
    %962 = vmatprep.subr.mxu0 0.0
    %963 = vmatpush1.msra.mxu0 %v944
    %964 = vmatprep.subr.mxu0 0.0
    %965 = vmatpush1.msra.mxu0 %v945
    %966 = vmatprep.subr.mxu0 0.0
    %967 = vmatpush1.msra.mxu0 %v946
    %968 = vmatprep.subr.mxu0 0.0
    %969 = vmatpush1.msra.mxu0 %v947
    %970 = vmatprep.subr.mxu0 0.0
    %971 = vmatpush1.msra.mxu0 %v948
    %972 = vmatprep.subr.mxu0 0.0
    %973 = vmatpush1.msra.mxu0 %v949
    %974 = vmatprep.subr.mxu0 0.0
    %975 = vmatpush1.msra.mxu0 %v950
    %976 = vmatprep.subr.mxu0 0.0
    %977 = vmatpush1.msra.mxu0 %v951
    %978 = vmatprep.subr.mxu0 0.0
    %979 = vmatpush1.msra.mxu0 %v952
    %980 = vmatprep.subr.mxu0 0.0
    %981 = vmatpush1.msra.mxu0 %v953
    %982 = vmatprep.subr.mxu0 0.0
    %983 = vmatpush1.msra.mxu0 %v954
    %984 = vmatprep.subr.mxu0 0.0
    %985 = vmatpush1.msra.mxu0 %v955
    %986 = vmatprep.subr.mxu0 0.0
    %987 = vmatpush1.msra.mxu0 %v956
    %988 = vmatprep.subr.mxu0 0.0
    %989 = vmatpush1.msra.mxu0 %v957
    %990 = vmatprep.subr.mxu0 0.0
    %991 = vmatpush1.msra.mxu0 0.0
    %992 = vmatprep.subr.mxu0 0.0
    %993 = vmatpush1.msra.mxu0 0.0
    %994 = vmatprep.subr.mxu0 0.0
    %995 = vmatpush1.msra.mxu0 0.0
    %996 = vmatprep.subr.mxu0 0.0
    %997 = vmatpush1.msra.mxu0 0.0
    %998 = vmatprep.subr.mxu0 0.0
    %999 = vmatpush1.msra.mxu0 0.0
    %1000 = vmatprep.subr.mxu0 0.0
    %1001 = vmatpush1.msra.mxu0 0.0
    %1002 = vmatprep.subr.mxu0 0.0
    %1003 = vmatpush1.msra.mxu0 0.0
    %1004 = vmatprep.subr.mxu0 0.0
    %1005 = vmatpush1.msra.mxu0 0.0
    %1006 = vmatprep.subr.mxu0 0.0
    %1007 = vmatpush1.msra.mxu0 0.0
    %1008 = vmatprep.subr.mxu0 0.0
    %1009 = vmatpush1.msra.mxu0 0.0
    %1010 = vmatprep.subr.mxu0 0.0
    %1011 = vmatpush1.msra.mxu0 0.0
    %1012 = vmatprep.subr.mxu0 0.0
    %1013 = vmatpush1.msra.mxu0 0.0
    %1014 = vmatprep.subr.mxu0 0.0
    %1015 = vmatpush1.msra.mxu0 0.0
    %1016 = vmatprep.subr.mxu0 0.0
    %1017 = vmatpush1.msra.mxu0 0.0
    %1018 = vmatprep.subr.mxu0 0.0
    %1019 = vmatpush1.msra.mxu0 0.0
    %1020 = vmatprep.subr.mxu0 0.0
    %1021 = vmatpush1.msra.mxu0 0.0
    %1022 = vmatprep.mubr.f32.mxu0 0.0
    %1023 = vmatmul.mubr.f32.gmra.mrb[0].mxu0 %v941
    %v1024 = vpop.f32.mrb[0].mxu0
    %v1025 = vadd.f32 0.0, %v1024
    %v1026 = vpop.f32.mrb[0].mxu0
    %1027 = vdwg.mxu0
    %v1028 = vmul.f32 %v1025, %v470
    %v1029 = vmul.f32 %v1028, %v1028
    %v1031 = vrot.slane %v1029, 7
    %v1033 = vsub.f32 %v1028, %v1031
    %v1034 = vld [vmem:[%s5] sm:$0x1]
    %v1035 = vadd.f32 %v1033, 1e-05
    %v1036 = vrsqrt.pop %v1035
    %v1039 = vunpack.c.l.s4 1966171168
    %v1040 = vunpack.c.0.s8 %v1039
    %v1041 = vlaneseq
    %v1042 = vshrl.u32 %v1041, 7
    %v1043 = vsub.s32 %v1040, %v1042
    %v1044 = vrot.slane %v1036, %v1043
    %v1045 = vcombine.high %v1044, %v1044
    %v1047 = vunpack.c.l.s4 1966171168
    %v1048 = vunpack.c.0.s8 %v1047
    %v1049 = vlaneseq
    %v1050 = vshrl.u32 %v1049, 7
    %v1051 = vsub.s32 %v1048, %v1050
    %v1052 = vrot.slane %v1045, %v1051
    %v1054 = vmul.f32 %v1034, %v1052
    %v1055 = vld [vmem:[%s6] sm:$0x1]
    %v1056 = vmul.f32 %v1028, %v1054
    %v1057 = vsub.f32 %v1055, %v1056
    %v1059 = vlaneseq
    %v1060 = vshrl.u32 %v1059, 7
    %v1061 = vsub.s32 0, %v1060
    %v1062 = vrot.slane %v1057, %v1061
    %v1064 = vsel %vm382, %v1054, %v1062
    %v1065 = vld [vmem:[%s10] sm:$0xff]
    %v1067 = vsel %vm509, %v1064, 0
    %1069 = vmatprep.subr.mxu0 0.0
    %1070 = vmatpush1.msra.mxu0 %v1065
    %1071 = vmatprep.subr.mxu0 0.0
    %1072 = vmatpush1.msra.mxu0 0.0
    %1073 = vmatprep.subr.mxu0 0.0
    %1074 = vmatpush1.msra.mxu0 0.0
    %1075 = vmatprep.subr.mxu0 0.0
    %1076 = vmatpush1.msra.mxu0 0.0
    %1077 = vmatprep.subr.mxu0 0.0
    %1078 = vmatpush1.msra.mxu0 0.0
    %1079 = vmatprep.subr.mxu0 0.0
    %1080 = vmatpush1.msra.mxu0 0.0
    %1081 = vmatprep.subr.mxu0 0.0
    %1082 = vmatpush1.msra.mxu0 0.0
    %1083 = vmatprep.subr.mxu0 0.0
    %1084 = vmatpush1.msra.mxu0 0.0
    %1085 = vmatprep.subr.mxu0 0.0
    %1086 = vmatpush1.msra.mxu0 0.0
    %1087 = vmatprep.subr.mxu0 0.0
    %1088 = vmatpush1.msra.mxu0 0.0
    %1089 = vmatprep.subr.mxu0 0.0
    %1090 = vmatpush1.msra.mxu0 0.0
    %1091 = vmatprep.subr.mxu0 0.0
    %1092 = vmatpush1.msra.mxu0 0.0
    %1093 = vmatprep.subr.mxu0 0.0
    %1094 = vmatpush1.msra.mxu0 0.0
    %1095 = vmatprep.subr.mxu0 0.0
    %1096 = vmatpush1.msra.mxu0 0.0
    %1097 = vmatprep.subr.mxu0 0.0
    %1098 = vmatpush1.msra.mxu0 0.0
    %1099 = vmatprep.subr.mxu0 0.0
    %1100 = vmatpush1.msra.mxu0 0.0
    %1101 = vmatprep.subr.mxu0 0.0
    %1102 = vmatpush1.msra.mxu0 0.0
    %1103 = vmatprep.subr.mxu0 0.0
    %1104 = vmatpush1.msra.mxu0 0.0
    %1105 = vmatprep.subr.mxu0 0.0
    %1106 = vmatpush1.msra.mxu0 0.0
    %1107 = vmatprep.subr.mxu0 0.0
    %1108 = vmatpush1.msra.mxu0 0.0
    %1109 = vmatprep.subr.mxu0 0.0
    %1110 = vmatpush1.msra.mxu0 0.0
    %1111 = vmatprep.subr.mxu0 0.0
    %1112 = vmatpush1.msra.mxu0 0.0
    %1113 = vmatprep.subr.mxu0 0.0
    %1114 = vmatpush1.msra.mxu0 0.0
    %1115 = vmatprep.subr.mxu0 0.0
    %1116 = vmatpush1.msra.mxu0 0.0
    %1117 = vmatprep.subr.mxu0 0.0
    %1118 = vmatpush1.msra.mxu0 0.0
    %1119 = vmatprep.subr.mxu0 0.0
    %1120 = vmatpush1.msra.mxu0 0.0
    %1121 = vmatprep.subr.mxu0 0.0
    %1122 = vmatpush1.msra.mxu0 0.0
    %1123 = vmatprep.subr.mxu0 0.0
    %1124 = vmatpush1.msra.mxu0 0.0
    %1125 = vmatprep.subr.mxu0 0.0
    %1126 = vmatpush1.msra.mxu0 0.0
    %1127 = vmatprep.subr.mxu0 0.0
    %1128 = vmatpush1.msra.mxu0 0.0
    %1129 = vmatprep.subr.mxu0 0.0
    %1130 = vmatpush1.msra.mxu0 0.0
    %1131 = vmatprep.subr.mxu0 0.0
    %1132 = vmatpush1.msra.mxu0 0.0
    %1133 = vmatprep.mubr.f32.mxu0 0.0
    %1134 = vmatmul.mubr.f32.gmra.mrb[0].mxu0 %v1067
    %v1135 = vpop.f32.mrb[0].mxu0
    %v1136 = vadd.f32 0.0, %v1135
    %v1137 = vpop.f32.mrb[0].mxu0
    %1138 = vdwg.mxu0
    %v1139 = vlaneseq
    %v1140 = vshrl.u32 %v1139, 7
    %v1141 = vsub.s32 0, %v1140
    %v1142 = vrot.slane %v1136, %v1141
    %v1143 = vmul.f32 %v905, %v1142
    %v1144 = vmul.f32 %v908, %v1142
    %v1145 = vmul.f32 %v913, %v1142
    %v1146 = vmul.f32 %v916, %v1142
    %v1147 = vlaneseq
    %v1148 = vshrl.u32 %v1147, 7
    %v1149 = vsub.s32 1, %v1148
    %v1150 = vrot.slane %v1136, %v1149
    %v1151 = vadd.f32 %v1143, %v1150
    %v1152 = vadd.f32 %v1144, %v1150
    %v1153 = vadd.f32 %v1145, %v1150
    %v1154 = vadd.f32 %v1146, %v1150
    %v1155 = vld [vmem:[#allocation8] sm:$0xff]
    %v1156 = vld [vmem:[#allocation8 + $0x8] sm:$0xff]
    %v1157 = vld [vmem:[#allocation8 + $0x10] sm:$0xff]
    %v1158 = vld [vmem:[#allocation8 + $0x18] sm:$0xff]
    %v1159 = vadd.f32 %v1151, %v1155
    %v1160 = vadd.f32 %v1152, %v1156
    %v1161 = vadd.f32 %v1153, %v1157
    %v1162 = vadd.f32 %v1154, %v1158
    %v1163 = vmax.f32 %v1159, 0.0
    %v1164 = vmax.f32 %v1160, 0.0
    %v1165 = vmax.f32 %v1161, 0.0
    %v1166 = vmax.f32 %v1162, 0.0
    %1167 = vst [vmem:[#allocation8] sm:$0xff] %v1163
    %1168 = vst [vmem:[#allocation8 + $0x8] sm:$0xff] %v1164
    %1169 = vst [vmem:[#allocation8 + $0x10] sm:$0xff] %v1165
    %1170 = vst [vmem:[#allocation8 + $0x18] sm:$0xff] %v1166
    // Predicated region
    $region54: #{tpu_custom_call.1} parent=1 // pred_check
      _
    $region55: #{tpu_custom_call.1} parent=1 // pred_check_branch
      %1172 = sbr.rel (0) target = $region57
    $region56: #{tpu_custom_call.1} parent=1 // pred_region
      %s1174 = ssub.s32 512, 512
      %1175 = vsyncadd [#allocation5], %s1174
      %s1176 = sshll.u32 [#allocation8], 4
      %s1177 = int_to_ptr.vmem [resolvable:$true] %s1176
      %1182 = dma.vmem_to_hbm [thread:$0]  %s1177, 512, %s11, [#allocation5], 128, 128, 8
    $region57: #{tpu_custom_call.1} parent=1 // pred_fallthru
      _
    // Predicated region
    $region58: #{tpu_custom_call.1} parent=1 // pred_check
      _
    $region59: #{tpu_custom_call.1} parent=1 // pred_check_branch
      %1184 = sbr.rel (0) target = $region61
    $region60: #{tpu_custom_call.1} parent=1 // pred_region
      %1185 = dma.done [#allocation5], 512
    $region61: #{tpu_custom_call.1} parent=1 // pred_fallthru
      _
    %1186 = vsyncpa [#allocation4], 1
    %1187 = vsyncpa [#allocation7], 1
    %1188 = vsyncpa [#allocation5], 1

</llo_original>
